<compile_context>
chip_gen: v7x
topology: tpu7x:2x2x1
jax: 0.10.0
libtpu: 0.0.40
codegen_flags: <defaults>
</compile_context>

<pallas_src>
import jax
import jax.numpy as jnp
from jax import lax
from jax.experimental import pallas as pl
from jax.experimental.pallas import tpu as pltpu


# ----------------------------------------------------------------------------
# Kernel 1: fused backbone — two pointwise (1x1) conv + bias + ReLU stages,
# channel-major blocks (C, TM), pixel tile TM on the lane axis.
# ----------------------------------------------------------------------------
def _backbone_stages(x_ref, w1_ref, b1_ref, w2_ref, b2_ref):
    # x_ref: (1, Cin, TM) f32; w1: (C1, Cin) f32; w2: (C2, C1) bf16;
    # b1/b2: (C, 1) f32.  Returns (y, z) = stage-1 / stage-2 activations (f32).
    x = x_ref[0]                                   # (Cin, TM)
    w1 = w1_ref[...]                               # (C1, Cin)
    cin = w1.shape[1]
    # Stage 1 on the VPU: K = Cin is tiny, so Cin broadcast-FMAs beat feeding
    # a K=4 matmul into the 128/256-deep systolic array (v5e note in review).
    acc = w1[:, 0:1] * x[0:1, :]                   # (C1, TM)
    for k in range(1, cin):
        acc = acc + w1[:, k:k + 1] * x[k:k + 1, :]
    y = jnp.maximum(acc + b1_ref[...], 0.0)        # (C1, TM) f32
    # Stage 2 on the MXU (bf16 operands, f32 accumulation).
    z = jnp.dot(w2_ref[...], y.astype(jnp.bfloat16),
                preferred_element_type=jnp.float32)  # (C2, TM) f32
    z = jnp.maximum(z + b2_ref[...], 0.0)
    return y, z


def _backbone_kernel_l2(x_ref, w1_ref, b1_ref, w2_ref, b2_ref, f2_ref):
    # Fast path used by SegmNet (segm_layers=['layer2']): no layer1 writeback.
    _, z = _backbone_stages(x_ref, w1_ref, b1_ref, w2_ref, b2_ref)
    f2_ref[0] = z.astype(f2_ref.dtype)


def _backbone_kernel_both(x_ref, w1_ref, b1_ref, w2_ref, b2_ref, f1_ref, f2_ref):
    y, z = _backbone_stages(x_ref, w1_ref, b1_ref, w2_ref, b2_ref)
    f1_ref[0] = y.astype(f1_ref.dtype)
    f2_ref[0] = z.astype(f2_ref.dtype)


def backbone_features(x_nchw, params, layers=("layer1", "layer2"),
                      tm=4096, feat_dtype=jnp.bfloat16):
    """Fused two-stage pointwise conv + ReLU backbone.

    x_nchw: [B, Cin, H, W] (PyTorch layout).  Returns a dict of the requested
    feature maps in [B, C, H, W] layout, stored as `feat_dtype` (bf16 halves
    the writeback and the predictor's read DMA; matmuls downcast anyway).
    """
    B, Cin, H, W = x_nchw.shape
    HW = H * W
    C1 = params["w1"].shape[1]
    C2 = params["w2"].shape[1]

    x3 = x_nchw.reshape(B, Cin, HW).astype(jnp.float32)

    # Pixel-tile width (lane axis): multiple of 128 when possible; Pallas
    # masks the partial last block, so no wrapper-side jnp.pad pass over HBM.
    if HW % 128 == 0:
        tm = max(128, (min(tm, HW) // 128) * 128)
    else:
        tm = HW                                    # full-extent lane block
    n_t = pl.cdiv(HW, tm)

    w1t = params["w1"].T.astype(jnp.float32)       # (C1, Cin) — VPU stage
    b1 = params["b1"].reshape(C1, 1).astype(jnp.float32)
    w2t = params["w2"].T.astype(jnp.bfloat16)      # (C2, C1) — MXU stage
    b2 = params["b2"].reshape(C2, 1).astype(jnp.float32)

    in_specs = [
        pl.BlockSpec((1, Cin, tm), lambda b, t: (b, 0, t)),
        pl.BlockSpec((C1, Cin), lambda b, t: (0, 0)),
        pl.BlockSpec((C1, 1), lambda b, t: (0, 0)),
        pl.BlockSpec((C2, C1), lambda b, t: (0, 0)),
        pl.BlockSpec((C2, 1), lambda b, t: (0, 0)),
    ]

    want_l1 = "layer1" in layers
    if want_l1:
        kernel = _backbone_kernel_both
        out_shape = (jax.ShapeDtypeStruct((B, C1, HW), feat_dtype),
                     jax.ShapeDtypeStruct((B, C2, HW), feat_dtype))
        out_specs = [pl.BlockSpec((1, C1, tm), lambda b, t: (b, 0, t)),
                     pl.BlockSpec((1, C2, tm), lambda b, t: (b, 0, t))]
    else:
        kernel = _backbone_kernel_l2
        out_shape = jax.ShapeDtypeStruct((B, C2, HW), feat_dtype)
        out_specs = pl.BlockSpec((1, C2, tm), lambda b, t: (b, 0, t))

    res = pl.pallas_call(
        kernel,
        out_shape=out_shape,
        grid_spec=pltpu.PrefetchScalarGridSpec(
            num_scalar_prefetch=0,
            grid=(B, n_t),                         # batch x pixel tiles
            in_specs=in_specs,
            out_specs=out_specs,
        ),
        compiler_params=pltpu.CompilerParams(
            dimension_semantics=("parallel", "parallel")),
    )(x3, w1t, b1, w2t, b2)

    feats = {}
    if want_l1:
        f1, f2 = res
        feats["layer1"] = f1.reshape(B, C1, H, W)
    else:
        f2 = res
    if "layer2" in layers:
        feats["layer2"] = f2.reshape(B, C2, H, W)
    return feats


# ----------------------------------------------------------------------------
# Kernel 2: segmentation predictor (per-batch-element grid), channel-major.
#
# Exact prototype reformulation of mean-pooled cosine similarity:
#   protoT (C,2) = rf_norm (C,HW) @ mskT (HW,2)      [mskT = mask / sum(mask)]
#   scores (2,HW) = protoT^T (2,C) . tf_norm (C,HW)   [contract channel majors]
# ----------------------------------------------------------------------------
def _segm_scores(tf, rf, mskT):
    # tf, rf: (C, HW) bf16 channel-major features; mskT: (HW, 2) bf16 weights.
    tf32 = tf.astype(jnp.float32)
    rf32 = rf.astype(jnp.float32)
    # F.normalize over the channel (sublane) axis, f32 math.
    tf_n = tf32 * lax.rsqrt(jnp.sum(tf32 * tf32, axis=0, keepdims=True) + 1e-6)
    rf_n = rf32 * lax.rsqrt(jnp.sum(rf32 * rf32, axis=0, keepdims=True) + 1e-6)

    # fg/bg prototypes = mask-weighted means of rf_n: (C,HW)@(HW,2) -> (C,2).
    protoT = jnp.dot(rf_n.astype(jnp.bfloat16), mskT,
                     preferred_element_type=jnp.float32)

    # Cosine scores for every test pixel: contract the channel (major) dims —
    # only the tiny (C,2) operand is effectively transposed, never tf.
    scores = lax.dot_general(protoT.astype(jnp.bfloat16),
                             tf_n.astype(jnp.bfloat16),
                             dimension_numbers=(((0,), (0,)), ((), ())),
                             preferred_element_type=jnp.float32)  # (2, HW)
    return scores


def _segm_pred_kernel_dist(tf_ref, rf_ref, mskT_ref, gain_ref, o_ref):
    # gain = [dist_prior ; ones] -> the distance prior is one VPU multiply.
    o_ref[0] = _segm_scores(tf_ref[0], rf_ref[0], mskT_ref[0]) * gain_ref[0]


def _segm_pred_kernel_nodist(tf_ref, rf_ref, mskT_ref, o_ref):
    o_ref[0] = _segm_scores(tf_ref[0], rf_ref[0], mskT_ref[0])


def segm_predictor(test_feat_segm, train_feat_segm, train_masks, test_dist=None):
    """Mirrors segm_predictor(test_feats, train_feats, train_masks, test_dist).

    Features are [B, C, H, W]; returns [B, 2, H, W] fg/bg logits.
    """
    tf = test_feat_segm[-1]                # deepest layer, (B, C, H, W)
    rf = train_feat_segm[-1]
    mask = train_masks[0]                  # (B, H, W)
    B, C, H, W = tf.shape
    HW = H * W

    tf3 = tf.reshape(B, C, HW)
    rf3 = rf.reshape(B, C, HW)
    if tf3.dtype != jnp.bfloat16:
        tf3 = tf3.astype(jnp.bfloat16)
    if rf3.dtype != jnp.bfloat16:
        rf3 = rf3.astype(jnp.bfloat16)

    # Mean-pool weights precomputed in the wrapper (1/sum folded into the mask)
    # in (HW, 2) orientation so the prototype matmul is in standard MXU form.
    eps = 1e-6
    m = mask.reshape(B, HW).astype(jnp.float32)
    fg_w = m / (jnp.sum(m, axis=-1, keepdims=True) + eps)
    bg = 1.0 - m
    bg_w = bg / (jnp.sum(bg, axis=-1, keepdims=True) + eps)
    mskT = jnp.stack([fg_w, bg_w], axis=-1).astype(jnp.bfloat16)   # (B, HW, 2)

    feat_spec = pl.BlockSpec((1, C, HW), lambda b: (b, 0, 0))
    mskT_spec = pl.BlockSpec((1, HW, 2), lambda b: (b, 0, 0))
    gain_spec = pl.BlockSpec((1, 2, HW), lambda b: (b, 0, 0))
    out_spec = pl.BlockSpec((1, 2, HW), lambda b: (b, 0, 0))

    if test_dist is not None:
        d = test_dist[0].reshape(B, 1, HW).astype(jnp.float32)
        # Distance prior scales the foreground channel only (D3S convention);
        # the background row gets unit gain.
        gain = jnp.concatenate([d, jnp.ones_like(d)], axis=1)      # (B, 2, HW)
        kernel = _segm_pred_kernel_dist
        in_specs = [feat_spec, feat_spec, mskT_spec, gain_spec]
        args = (tf3, rf3, mskT, gain)
    else:
        kernel = _segm_pred_kernel_nodist
        in_specs = [feat_spec, feat_spec, mskT_spec]
        args = (tf3, rf3, mskT)

    out = pl.pallas_call(
        kernel,
        out_shape=jax.ShapeDtypeStruct((B, 2, HW), jnp.float32),
        grid_spec=pltpu.PrefetchScalarGridSpec(
            num_scalar_prefetch=0,
            grid=(B,),                     # tiny per-step work; see module TODO
            in_specs=in_specs,
            out_specs=out_spec,
        ),
        compiler_params=pltpu.CompilerParams(
            dimension_semantics=("parallel",)),
    )(*args)

    # Lane-dense (B, 2, HW) kernel output -> (B, 2, H, W): free reshape.
    return out.reshape(B, 2, H, W)


# ----------------------------------------------------------------------------
# Synthetic backbone wrapper with named layers.
# ----------------------------------------------------------------------------
class FeatureExtractor:
    def __init__(self, params):
        self.params = params

    def __call__(self, im, layers):
        return backbone_features(im, self.params, layers=tuple(layers))


# ----------------------------------------------------------------------------
# SegmNet — same structure / forward semantics as the PyTorch module.
# ----------------------------------------------------------------------------
class SegmNet:
    def __init__(self, feature_extractor, segm_predictor, segm_layers,
                 extractor_grad=True):
        self.feature_extractor = feature_extractor
        self.segm_predictor = segm_predictor
        self.segm_layers = segm_layers
        # TODO(synk): extractor_grad only toggles requires_grad in PyTorch; no
        # autodiff state to freeze in this forward-only Pallas port.

    def forward(self, train_imgs, test_imgs, train_masks, test_dist=None):
        # Train + test frames share ONE fused backbone launch (batch concat):
        # halves launch fixed cost and gives the pipeline / both v7x TCs more
        # grid steps to overlap DMA with compute.
        n_train = train_imgs.shape[0]
        all_imgs = jnp.concatenate([train_imgs, test_imgs], axis=0)
        all_feat = self.extract_backbone_features(all_imgs)
        train_feat_segm = [f[:n_train] for f in all_feat.values()]
        test_feat_segm = [f[n_train:] for f in all_feat.values()]
        train_masks = [train_masks]
        if test_dist is not None:
            test_dist = [test_dist]
        segm_pred = self.segm_predictor(test_feat_segm, train_feat_segm,
                                        train_masks, test_dist)
        return segm_pred

    def extract_backbone_features(self, im, layers=None):
        if layers is None:
            layers = self.segm_layers
        return self.feature_extractor(im, layers)

    def extract_features(self, im, layers):
        return self.feature_extractor(im, layers)


# ----------------------------------------------------------------------------
# Pure-JAX f32 reference (prototype form == mean-pooled similarity, linear).
# ----------------------------------------------------------------------------
def segmnet_ref(train_imgs, test_imgs, train_masks, test_dist, params):
    def feats(x):
        b, cin, h, w = x.shape
        x2 = x.reshape(b, cin, h * w).astype(jnp.float32)
        w1t = params["w1"].T.astype(jnp.float32)
        w2t = params["w2"].T.astype(jnp.float32)
        y = jnp.maximum(jnp.einsum("ck,bks->bcs", w1t, x2)
                        + params["b1"][None, :, None], 0.0)
        z = jnp.maximum(jnp.einsum("ck,bks->bcs", w2t, y)
                        + params["b2"][None, :, None], 0.0)
        return z

    tfz, rfz = feats(test_imgs), feats(train_imgs)

    def nrm(f):
        return f * lax.rsqrt(jnp.sum(f * f, axis=1, keepdims=True) + 1e-6)

    tfn, rfn = nrm(tfz), nrm(rfz)
    b, _, hw = tfn.shape
    h, w = train_imgs.shape[2], train_imgs.shape[3]
    m = train_masks.reshape(b, hw).astype(jnp.float32)
    fg_w = m / (jnp.sum(m, -1, keepdims=True) + 1e-6)
    bg = 1.0 - m
    bg_w = bg / (jnp.sum(bg, -1, keepdims=True) + 1e-6)
    p_fg = jnp.einsum("bcs,bs->bc", rfn, fg_w)
    p_bg = jnp.einsum("bcs,bs->bc", rfn, bg_w)
    fg_s = jnp.einsum("bc,bcs->bs", p_fg, tfn)
    bg_s = jnp.einsum("bc,bcs->bs", p_bg, tfn)
    if test_dist is not None:
        fg_s = fg_s * test_dist.reshape(b, hw)
    return jnp.stack([fg_s, bg_s], axis=1).reshape(b, 2, h, w)


# ----------------------------------------------------------------------------
if __name__ == "__main__":
    B, Cin, H, W = 2, 4, 16, 16
    C1, C2 = 16, 32

    key = jax.random.PRNGKey(0)
    k_tr, k_te, k_m, k_w1, k_b1, k_w2, k_b2 = jax.random.split(key, 7)

    # NCHW inputs, matching the PyTorch module.
    train_imgs = jax.random.normal(k_tr, (B, Cin, H, W), jnp.float32)
    test_imgs = jax.random.normal(k_te, (B, Cin, H, W), jnp.float32)
    train_masks = (jax.random.normal(k_m, (B, H, W)) > 0.0).astype(jnp.float32)

    # Centred-Gaussian distance prior for the test frame.
    yy = jnp.arange(H, dtype=jnp.float32) - (H - 1) / 2.0
    xx = jnp.arange(W, dtype=jnp.float32) - (W - 1) / 2.0
    dist = jnp.exp(-(yy[:, None] ** 2 + xx[None, :] ** 2)
                   / (2.0 * (H / 4.0) ** 2))
    test_dist = jnp.broadcast_to(dist, (B, H, W))

    params = {
        "w1": 0.1 * jax.random.normal(k_w1, (Cin, C1), jnp.float32),
        "b1": 0.01 * jax.random.normal(k_b1, (C1,), jnp.float32),
        "w2": 0.1 * jax.random.normal(k_w2, (C1, C2), jnp.float32),
        "b2": 0.01 * jax.random.normal(k_b2, (C2,), jnp.float32),
    }

    net = SegmNet(
        feature_extractor=FeatureExtractor(params),
        segm_predictor=segm_predictor,
        segm_layers=["layer2"],
        extractor_grad=False,
    )

    # Distance-prior path.
    pred = net.forward(train_imgs, test_imgs, train_masks, test_dist)
    jax.block_until_ready(pred)
    assert pred.shape == (B, 2, H, W)
    assert bool(jnp.all(jnp.isfinite(pred)))
    ref = segmnet_ref(train_imgs, test_imgs, train_masks, test_dist, params)
    err = float(jnp.max(jnp.abs(pred - ref)))
    assert err < 8e-2, f"dist-path max abs error vs f32 reference: {err}"

    # No-distance-prior path (separate kernel; no gain DMA / multiply).
    pred_nd = net.forward(train_imgs, test_imgs, train_masks, None)
    jax.block_until_ready(pred_nd)
    assert pred_nd.shape == (B, 2, H, W)
    assert bool(jnp.all(jnp.isfinite(pred_nd)))
    ref_nd = segmnet_ref(train_imgs, test_imgs, train_masks, None, params)
    err_nd = float(jnp.max(jnp.abs(pred_nd - ref_nd)))
    assert err_nd < 8e-2, f"no-dist max abs error vs f32 reference: {err_nd}"

    # Also exercise the both-layers backbone variant (layer1 + layer2 stores).
    feats_both = net.extract_features(train_imgs, ["layer1", "layer2"])
    jax.block_until_ready(feats_both["layer2"])
    assert feats_both["layer1"].shape == (B, C1, H, W)
    assert feats_both["layer2"].shape == (B, C2, H, W)

    print("KERNEL_OK")
</pallas_src>

<mosaic_0001>
module attributes {stable_mosaic.version = 11 : i64} {
  func.func @_backbone_kernel_l2(%arg0: i32, %arg1: i32, %arg2: memref<1x4x256xf32, #tpu.memory_space<vmem>>, %arg3: memref<16x4xf32, #tpu.memory_space<vmem>>, %arg4: memref<16x1xf32, #tpu.memory_space<vmem>>, %arg5: memref<32x16xbf16, #tpu.memory_space<vmem>>, %arg6: memref<32x1xf32, #tpu.memory_space<vmem>>, %arg7: memref<1x32x256xbf16, #tpu.memory_space<vmem>>) attributes {dimension_semantics = [#tpu.dimension_semantics<parallel>, #tpu.dimension_semantics<parallel>], iteration_bounds = array<i64: 4, 1>, scalar_prefetch = 0 : i64, scratch_operands = 0 : i64, tpu.core_type = #tpu.core_type<tc>, window_params = [{transform_indices = @transform_0, window_bounds = array<i64: 1, 4, 256>}, {pipeline_mode = #tpu.pipeline_mode<synchronous>, transform_indices = @transform_1, window_bounds = array<i64: 16, 4>}, {pipeline_mode = #tpu.pipeline_mode<synchronous>, transform_indices = @transform_2, window_bounds = array<i64: 16, 1>}, {pipeline_mode = #tpu.pipeline_mode<synchronous>, transform_indices = @transform_3, window_bounds = array<i64: 32, 16>}, {pipeline_mode = #tpu.pipeline_mode<synchronous>, transform_indices = @transform_4, window_bounds = array<i64: 32, 1>}, {transform_indices = @transform_5, window_bounds = array<i64: 1, 32, 256>}]} {
    %c0 = arith.constant 0 : index
    %c0_0 = arith.constant 0 : index
    %c0_1 = arith.constant 0 : index
    %0 = vector.load %arg2[%c0, %c0_0, %c0_1] : memref<1x4x256xf32, #tpu.memory_space<vmem>>, vector<1x4x256xf32>
    %1 = vector.shape_cast %0 : vector<1x4x256xf32> to vector<4x256xf32>
    %c0_2 = arith.constant 0 : index
    %c0_3 = arith.constant 0 : index
    %2 = vector.load %arg3[%c0_2, %c0_3] : memref<16x4xf32, #tpu.memory_space<vmem>>, vector<16x4xf32>
    %3 = vector.extract_strided_slice %2 {offsets = [0, 0], sizes = [16, 1], strides = [1, 1]} : vector<16x4xf32> to vector<16x1xf32>
    %4 = vector.extract_strided_slice %1 {offsets = [0, 0], sizes = [1, 256], strides = [1, 1]} : vector<4x256xf32> to vector<1x256xf32>
    %5 = vector.broadcast %3 : vector<16x1xf32> to vector<16x256xf32>
    %6 = vector.broadcast %4 : vector<1x256xf32> to vector<16x256xf32>
    %7 = arith.mulf %5, %6 : vector<16x256xf32>
    %8 = vector.extract_strided_slice %2 {offsets = [0, 1], sizes = [16, 1], strides = [1, 1]} : vector<16x4xf32> to vector<16x1xf32>
    %9 = vector.extract_strided_slice %1 {offsets = [1, 0], sizes = [1, 256], strides = [1, 1]} : vector<4x256xf32> to vector<1x256xf32>
    %10 = vector.broadcast %8 : vector<16x1xf32> to vector<16x256xf32>
    %11 = vector.broadcast %9 : vector<1x256xf32> to vector<16x256xf32>
    %12 = arith.mulf %10, %11 : vector<16x256xf32>
    %13 = arith.addf %7, %12 : vector<16x256xf32>
    %14 = vector.extract_strided_slice %2 {offsets = [0, 2], sizes = [16, 1], strides = [1, 1]} : vector<16x4xf32> to vector<16x1xf32>
    %15 = vector.extract_strided_slice %1 {offsets = [2, 0], sizes = [1, 256], strides = [1, 1]} : vector<4x256xf32> to vector<1x256xf32>
    %16 = vector.broadcast %14 : vector<16x1xf32> to vector<16x256xf32>
    %17 = vector.broadcast %15 : vector<1x256xf32> to vector<16x256xf32>
    %18 = arith.mulf %16, %17 : vector<16x256xf32>
    %19 = arith.addf %13, %18 : vector<16x256xf32>
    %20 = vector.extract_strided_slice %2 {offsets = [0, 3], sizes = [16, 1], strides = [1, 1]} : vector<16x4xf32> to vector<16x1xf32>
    %21 = vector.extract_strided_slice %1 {offsets = [3, 0], sizes = [1, 256], strides = [1, 1]} : vector<4x256xf32> to vector<1x256xf32>
    %22 = vector.broadcast %20 : vector<16x1xf32> to vector<16x256xf32>
    %23 = vector.broadcast %21 : vector<1x256xf32> to vector<16x256xf32>
    %24 = arith.mulf %22, %23 : vector<16x256xf32>
    %25 = arith.addf %19, %24 : vector<16x256xf32>
    %c0_4 = arith.constant 0 : index
    %c0_5 = arith.constant 0 : index
    %26 = vector.load %arg4[%c0_4, %c0_5] : memref<16x1xf32, #tpu.memory_space<vmem>>, vector<16x1xf32>
    %27 = vector.broadcast %26 : vector<16x1xf32> to vector<16x256xf32>
    %28 = arith.addf %25, %27 : vector<16x256xf32>
    %cst = arith.constant 0.000000e+00 : f32
    %29 = vector.broadcast %cst : f32 to vector<16x256xf32>
    %30 = arith.maximumf %28, %29 : vector<16x256xf32>
    %c0_6 = arith.constant 0 : index
    %c0_7 = arith.constant 0 : index
    %31 = vector.load %arg5[%c0_6, %c0_7] : memref<32x16xbf16, #tpu.memory_space<vmem>>, vector<32x16xbf16>
    %32 = arith.truncf %30 : vector<16x256xf32> to vector<16x256xbf16>
    %cst_8 = arith.constant dense<0.000000e+00> : vector<32x256xf32>
    %33 = tpu.matmul %31, %32, %cst_8 {dimension_numbers = #tpu.dot_dimension_numbers<[1], [0], [0], [1], [0, 0, 1, 1], [], []>} : vector<32x16xbf16>, vector<16x256xbf16>, vector<32x256xf32> -> vector<32x256xf32>
    %c0_9 = arith.constant 0 : index
    %c0_10 = arith.constant 0 : index
    %34 = vector.load %arg6[%c0_9, %c0_10] : memref<32x1xf32, #tpu.memory_space<vmem>>, vector<32x1xf32>
    %35 = vector.broadcast %34 : vector<32x1xf32> to vector<32x256xf32>
    %36 = arith.addf %33, %35 : vector<32x256xf32>
    %cst_11 = arith.constant 0.000000e+00 : f32
    %37 = vector.broadcast %cst_11 : f32 to vector<32x256xf32>
    %38 = arith.maximumf %36, %37 : vector<32x256xf32>
    %39 = arith.truncf %38 : vector<32x256xf32> to vector<32x256xbf16>
    %c0_12 = arith.constant 0 : index
    %c0_13 = arith.constant 0 : index
    %c0_14 = arith.constant 0 : index
    %40 = vector.load %arg7[%c0_12, %c0_13, %c0_14] : memref<1x32x256xbf16, #tpu.memory_space<vmem>>, vector<1x32x256xbf16>
    %41 = vector.shape_cast %40 : vector<1x32x256xbf16> to vector<32x256xbf16>
    %42 = vector.shape_cast %39 : vector<32x256xbf16> to vector<1x32x256xbf16>
    tpu.vector_store %arg7[%c0_12, %c0_13, %c0_14], %42 {strides = array<i32>} : memref<1x32x256xbf16, #tpu.memory_space<vmem>>, vector<1x32x256xbf16>,
    return
  }
  func.func @transform_0(%arg0: i32, %arg1: i32) -> (i32, i32, i32) {
    %c0_i32 = arith.constant 0 : i32
    %c0_i32_0 = arith.constant 0 : i32
    return %arg0, %c0_i32, %arg1 : i32, i32, i32
  }
  func.func @transform_1(%arg0: i32, %arg1: i32) -> (i32, i32) {
    %c0_i32 = arith.constant 0 : i32
    %c0_i32_0 = arith.constant 0 : i32
    %c0_i32_1 = arith.constant 0 : i32
    return %c0_i32, %c0_i32_0 : i32, i32
  }
  func.func @transform_2(%arg0: i32, %arg1: i32) -> (i32, i32) {
    %c0_i32 = arith.constant 0 : i32
    %c0_i32_0 = arith.constant 0 : i32
    %c0_i32_1 = arith.constant 0 : i32
    return %c0_i32, %c0_i32_0 : i32, i32
  }
  func.func @transform_3(%arg0: i32, %arg1: i32) -> (i32, i32) {
    %c0_i32 = arith.constant 0 : i32
    %c0_i32_0 = arith.constant 0 : i32
    %c0_i32_1 = arith.constant 0 : i32
    return %c0_i32, %c0_i32_0 : i32, i32
  }
  func.func @transform_4(%arg0: i32, %arg1: i32) -> (i32, i32) {
    %c0_i32 = arith.constant 0 : i32
    %c0_i32_0 = arith.constant 0 : i32
    %c0_i32_1 = arith.constant 0 : i32
    return %c0_i32, %c0_i32_0 : i32, i32
  }
  func.func @transform_5(%arg0: i32, %arg1: i32) -> (i32, i32, i32) {
    %c0_i32 = arith.constant 0 : i32
    %c0_i32_0 = arith.constant 0 : i32
    return %arg0, %c0_i32, %arg1 : i32, i32, i32
  }
}

</mosaic_0001>

<llo_original>
// kernel: tpu_custom_call.1
$region0: #{tpu_custom_call.1}
  #allocation0 [shape = 'u32[]', space=smem, size = 0x4, offset = 0x4, fixed_abs, tag = 'smem constant byte address 0x4 - core index']
  #allocation1 [shape = 'u32[144,128]{1,0:T(1,128)}', space=vmem, size = 0x12000, scoped, tag = 'internal scratch']
  %s0 = inlined_call_operand.vmem [shape: f32[4,4,256], index: 0, kind: input, shape index: {}]
  %s1 = inlined_call_operand.vmem [shape: f32[16,4], index: 1, kind: input, shape index: {}]
  %s2 = inlined_call_operand.vmem [shape: f32[16,1], index: 2, kind: input, shape index: {}]
  %s3 = inlined_call_operand.vmem [shape: bf16[32,16], index: 3, kind: input, shape index: {}]
  %s4 = inlined_call_operand.vmem [shape: f32[32,1], index: 4, kind: input, shape index: {}]
  %s5 = inlined_call_operand.hbm [shape: bf16[4,32,256], index: 5, kind: output, shape index: {}]
  %s6 = sld [smem:[#allocation0]]
  $region53: #{tpu_custom_call.1} parent=0
    _
  %s8 = ssub.s32 1, %s6
  %s9 = scalar_select 0, %s8, %s6
  $region1: #{tpu_custom_call.1} parent=0
    #allocation2 [shape = 'u8[32768]{0}', space=vmem, size = 0x8000, scoped, tag = 'output window, operand 0']
    #allocation3 [shape = 's32[2]{0}', space=sflag, size = 0x8, scoped, tag = 'scoped memory for tpu_custom_call.1']
    %10 = vsyncpa [#allocation3], 0
    %s11 = scalar_lea.sflag [#allocation3], 1
    %12 = vsyncpa %s11, 0
    loop: start=0, step=1, limit=6
    $region2: #{tpu_custom_call.1} parent=1 // loop_pre_header
      _
    $region3: #{tpu_custom_call.1} parent=1 // loop_header
      %s14 = sphi 0, %s18
      %p15 = scmp.ge.s32.totalorder %s14, 6
      %s21 = sphi 0, %s33
      %s22 = sphi 0, %s29
      %s23 = sphi 0, %s21
      %s24 = sphi 0, %s22
      %s25 = sphi 0, %s23
      %s26 = sphi 0, %s24
      %s38 = sphi 0, %s40
      %s41 = sphi 0, %s38
      %s42 = sphi 0, %s41
      %s58 = sphi 0, %s42
      %s62 = sphi 0, %s62
      %s64 = sphi 0, %s62
      %s65 = sphi 0, %s64
      %s79 = sphi 0, %s65
      %s83 = sphi 0, %s83
      %s85 = sphi 0, %s83
      %s86 = sphi 0, %s85
      %s100 = sphi 0, %s86
      %s104 = sphi 0, %s104
      %s106 = sphi 0, %s104
      %s107 = sphi 0, %s106
      %s121 = sphi 0, %s107
      %s125 = sphi 0, %s125
      %s127 = sphi 0, %s125
      %s128 = sphi 0, %s127
      %s142 = sphi 0, %s128
      %s150 = sphi 0, %s152
      %s153 = sphi 0, %s150
      %s154 = sphi 0, %s153
      %s170 = sphi 0, %s154
    $region4: #{tpu_custom_call.1} parent=1 // loop_header_branch
      %17 = sbr.rel (%p15) target = $region8
    $region5: #{tpu_custom_call.1} parent=1 // loop_body
      %s19 = ssub.s32 %s14, 1
      %s20 = ssub.s32 %s14, 2
      %s27 = sadd.s32 1, %s22
      %p28 = scmp.ge.s32.totalorder %s27, 1
      %s29 = scalar_select %p28, 0, %s27
      %s30 = sadd.s32 1, %s21
      %s31 = scalar_select %p28, %s30, %s21
      %p32 = scmp.ge.s32.totalorder %s31, 4
      %s33 = scalar_select %p32, 0, %s31
      %s34 = ssub.s32 %s21, %s33
      %s35 = ssub.s32 %s22, %s29
      %s36 = sor.u32 %s34, %s35
      %p37 = scmp.eq.s32.totalorder %s36, 0
      %s39 = sadd.s32 %s38, 1
      %s40 = scalar_select %p37, %s38, %s39
      %p43 = pneg %p37
      %p44 = scmp.eq.s32.totalorder %s14, 3
      %p45 = por %p43, %p44
      %p46 = scmp.ne.s32.totalorder %s38, %s41
      %p47 = scmp.eq.s32.totalorder %s14, 0
      %p48 = por %p46, %p47
      %p49 = scmp.ne.s32.totalorder %s38, %s41
      %p50 = scmp.eq.s32.totalorder %s19, 3
      %p51 = por %p49, %p50
      %p52 = scmp.ne.s32.totalorder %s41, %s42
      %p53 = scmp.eq.s32.totalorder %s19, 0
      %p54 = por %p52, %p53
      %p55 = scmp.ne.s32.totalorder %s41, %s42
      %p56 = scmp.eq.s32.totalorder %s20, 3
      %p57 = por %p55, %p56
      %p59 = scmp.ne.s32.totalorder %s42, %s58
      %p60 = scmp.eq.s32.totalorder %s20, 0
      %p61 = por %p59, %p60
      %s63 = sadd.s32 %s62, 1
      %p66 = scmp.eq.s32.totalorder %s14, 3
      %p67 = scmp.ne.s32.totalorder %s62, %s64
      %p68 = scmp.eq.s32.totalorder %s14, 0
      %p69 = por %p67, %p68
      %p70 = scmp.ne.s32.totalorder %s62, %s64
      %p71 = scmp.eq.s32.totalorder %s19, 3
      %p72 = por %p70, %p71
      %p73 = scmp.ne.s32.totalorder %s64, %s65
      %p74 = scmp.eq.s32.totalorder %s19, 0
      %p75 = por %p73, %p74
      %p76 = scmp.ne.s32.totalorder %s64, %s65
      %p77 = scmp.eq.s32.totalorder %s20, 3
      %p78 = por %p76, %p77
      %p80 = scmp.ne.s32.totalorder %s65, %s79
      %p81 = scmp.eq.s32.totalorder %s20, 0
      %p82 = por %p80, %p81
      %s84 = sadd.s32 %s83, 1
      %p87 = scmp.eq.s32.totalorder %s14, 3
      %p88 = scmp.ne.s32.totalorder %s83, %s85
      %p89 = scmp.eq.s32.totalorder %s14, 0
      %p90 = por %p88, %p89
      %p91 = scmp.ne.s32.totalorder %s83, %s85
      %p92 = scmp.eq.s32.totalorder %s19, 3
      %p93 = por %p91, %p92
      %p94 = scmp.ne.s32.totalorder %s85, %s86
      %p95 = scmp.eq.s32.totalorder %s19, 0
      %p96 = por %p94, %p95
      %p97 = scmp.ne.s32.totalorder %s85, %s86
      %p98 = scmp.eq.s32.totalorder %s20, 3
      %p99 = por %p97, %p98
      %p101 = scmp.ne.s32.totalorder %s86, %s100
      %p102 = scmp.eq.s32.totalorder %s20, 0
      %p103 = por %p101, %p102
      %s105 = sadd.s32 %s104, 1
      %p108 = scmp.eq.s32.totalorder %s14, 3
      %p109 = scmp.ne.s32.totalorder %s104, %s106
      %p110 = scmp.eq.s32.totalorder %s14, 0
      %p111 = por %p109, %p110
      %p112 = scmp.ne.s32.totalorder %s104, %s106
      %p113 = scmp.eq.s32.totalorder %s19, 3
      %p114 = por %p112, %p113
      %p115 = scmp.ne.s32.totalorder %s106, %s107
      %p116 = scmp.eq.s32.totalorder %s19, 0
      %p117 = por %p115, %p116
      %p118 = scmp.ne.s32.totalorder %s106, %s107
      %p119 = scmp.eq.s32.totalorder %s20, 3
      %p120 = por %p118, %p119
      %p122 = scmp.ne.s32.totalorder %s107, %s121
      %p123 = scmp.eq.s32.totalorder %s20, 0
      %p124 = por %p122, %p123
      %s126 = sadd.s32 %s125, 1
      %p129 = scmp.eq.s32.totalorder %s14, 3
      %p130 = scmp.ne.s32.totalorder %s125, %s127
      %p131 = scmp.eq.s32.totalorder %s14, 0
      %p132 = por %p130, %p131
      %p133 = scmp.ne.s32.totalorder %s125, %s127
      %p134 = scmp.eq.s32.totalorder %s19, 3
      %p135 = por %p133, %p134
      %p136 = scmp.ne.s32.totalorder %s127, %s128
      %p137 = scmp.eq.s32.totalorder %s19, 0
      %p138 = por %p136, %p137
      %p139 = scmp.ne.s32.totalorder %s127, %s128
      %p140 = scmp.eq.s32.totalorder %s20, 3
      %p141 = por %p139, %p140
      %p143 = scmp.ne.s32.totalorder %s128, %s142
      %p144 = scmp.eq.s32.totalorder %s20, 0
      %p145 = por %p143, %p144
      %s146 = ssub.s32 %s21, %s33
      %s147 = ssub.s32 %s22, %s29
      %s148 = sor.u32 %s146, %s147
      %p149 = scmp.eq.s32.totalorder %s148, 0
      %s151 = sadd.s32 %s150, 1
      %s152 = scalar_select %p149, %s150, %s151
      %p155 = pneg %p149
      %p156 = scmp.eq.s32.totalorder %s14, 3
      %p157 = por %p155, %p156
      %p158 = scmp.ne.s32.totalorder %s150, %s153
      %p159 = scmp.eq.s32.totalorder %s14, 0
      %p160 = por %p158, %p159
      %p161 = scmp.ne.s32.totalorder %s150, %s153
      %p162 = scmp.eq.s32.totalorder %s19, 3
      %p163 = por %p161, %p162
      %p164 = scmp.ne.s32.totalorder %s153, %s154
      %p165 = scmp.eq.s32.totalorder %s19, 0
      %p166 = por %p164, %p165
      %p167 = scmp.ne.s32.totalorder %s153, %s154
      %p168 = scmp.eq.s32.totalorder %s20, 3
      %p169 = por %p167, %p168
      %p171 = scmp.ne.s32.totalorder %s154, %s170
      %p172 = scmp.eq.s32.totalorder %s20, 0
      %p173 = por %p171, %p172
      %p174 = scmp.le.s32.totalorder 1, %s14
      %p175 = scmp.lt.s32.totalorder %s14, 5
      %p176 = pnand %p174, %p175
      %p177 = pneg %p176
      // Predicated region
      $region9: #{tpu_custom_call.1} parent=5 // pred_check
        _
      $region10: #{tpu_custom_call.1} parent=5 // pred_check_branch
        %179 = sbr.rel (%p176) target = $region12
      $region11: #{tpu_custom_call.1} parent=5 // pred_region
        %s180 = ssub.s32 %s14, 1
        // Predicated region
        $region13: #{tpu_custom_call.1} parent=11 // pred_check
          %p181 = pneg %p75
        $region14: #{tpu_custom_call.1} parent=11 // pred_check_branch
          %183 = sbr.rel (%p181) target = $region16
        $region15: #{tpu_custom_call.1} parent=11 // pred_region
          _
        $region16: #{tpu_custom_call.1} parent=11 // pred_fallthru
          _
        // Predicated region
        $region17: #{tpu_custom_call.1} parent=11 // pred_check
          %p184 = pneg %p96
        $region18: #{tpu_custom_call.1} parent=11 // pred_check_branch
          %186 = sbr.rel (%p184) target = $region20
        $region19: #{tpu_custom_call.1} parent=11 // pred_region
          _
        $region20: #{tpu_custom_call.1} parent=11 // pred_fallthru
          _
        // Predicated region
        $region21: #{tpu_custom_call.1} parent=11 // pred_check
          %p187 = pneg %p117
        $region22: #{tpu_custom_call.1} parent=11 // pred_check_branch
          %189 = sbr.rel (%p187) target = $region24
        $region23: #{tpu_custom_call.1} parent=11 // pred_region
          _
        $region24: #{tpu_custom_call.1} parent=11 // pred_fallthru
          _
        // Predicated region
        $region25: #{tpu_custom_call.1} parent=11 // pred_check
          %p190 = pneg %p138
        $region26: #{tpu_custom_call.1} parent=11 // pred_check_branch
          %192 = sbr.rel (%p190) target = $region28
        $region27: #{tpu_custom_call.1} parent=11 // pred_region
          _
        $region28: #{tpu_custom_call.1} parent=11 // pred_fallthru
          _
      $region12: #{tpu_custom_call.1} parent=5 // pred_fallthru
        _
      %p193 = scmp.lt.s32.totalorder %s14, 4
      // Predicated region
      $region29: #{tpu_custom_call.1} parent=5 // pred_check
        %p194 = pneg %p193
      $region30: #{tpu_custom_call.1} parent=5 // pred_check_branch
        %196 = sbr.rel (%p194) target = $region32
      $region31: #{tpu_custom_call.1} parent=5 // pred_region
        // Predicated region
        $region33: #{tpu_custom_call.1} parent=31 // pred_check
          %p197 = pneg %p48
        $region34: #{tpu_custom_call.1} parent=31 // pred_check_branch
          %199 = sbr.rel (%p197) target = $region36
        $region35: #{tpu_custom_call.1} parent=31 // pred_region
          %s200 = smul.u32 2, %s22
          %p201 = scmp.lt.s32.totalorder %s21, 3
          %s202 = scalar_select %p201, %s21, 3
          %p203 = scmp.lt.s32.totalorder %s200, 1
          %s204 = scalar_select %p203, %s200, 1
          %s205 = smul.addr %s202, 2
          %s206 = sadd.s32 %s204, %s205
          %s207 = smul.addr %s206, 4
          %s208 = scalar_lea.vmem %s0, %s207
          %s209 = smul.u32 2, %s22
        $region36: #{tpu_custom_call.1} parent=31 // pred_fallthru
          _
      $region32: #{tpu_custom_call.1} parent=5 // pred_fallthru
        _
      %p210 = scmp.le.s32.totalorder 1, %s14
      %p211 = scmp.lt.s32.totalorder %s14, 5
      %p212 = pnand %p210, %p211
      %p213 = pneg %p212
      // Predicated region
      $region37: #{tpu_custom_call.1} parent=5 // pred_check
        _
      $region38: #{tpu_custom_call.1} parent=5 // pred_check_branch
        %215 = sbr.rel (%p212) target = $region40
      $region39: #{tpu_custom_call.1} parent=5 // pred_region
        %s216 = ssub.s32 %s14, 1
        %s217 = smul.u32 2, %s24
        %p218 = scmp.lt.s32.totalorder %s23, 3
        %s219 = scalar_select %p218, %s23, 3
        %p220 = scmp.lt.s32.totalorder %s217, 1
        %s221 = scalar_select %p220, %s217, 1
        %s222 = smul.addr %s219, 2
        %s223 = sadd.s32 %s221, %s222
        %s224 = smul.addr %s223, 4
        %s225 = scalar_lea.vmem %s0, %s224
        %p226 = pneg %p54
        %p227 = pneg %p51
        %p228 = pneg %p75
        %p229 = pneg %p72
        %p230 = pneg %p96
        %p231 = pneg %p93
        %p232 = pneg %p117
        %p233 = pneg %p114
        %p234 = pneg %p138
        %p235 = pneg %p135
        %p236 = pneg %p166
        %p237 = pneg %p163
        %s238 = sand.u32 %s153, 1
        %s239 = scalar_lea.sflag [#allocation3], %s238
        %s240 = sand.u32 %s153, 1
        %s241 = smul.addr %s240, 32
        %s242 = scalar_lea.vmem [#allocation2], %s241
        %s243 = smul.u32 2, %s24
        %p244 = scmp.lt.s32.totalorder %s23, 3
        %s245 = scalar_select %p244, %s23, 3
        %p246 = scmp.lt.s32.totalorder %s243, 1
        %s247 = scalar_select %p246, %s243, 1
        %s248 = smul.addr %s245, 2
        %s249 = sadd.s32 %s247, %s248
        %s250 = smul.addr %s249, 4
        %s251 = scalar_lea.vmem %s0, %s250
        %s252 = smul.u32 2, %s24
        %s253 = smul.u32 2, %s24
        %v255 = vld [vmem:[%s251] sm:$0xff]
        %v256 = vld [vmem:[%s1] sm:$0xff]
        %v257 = vld [vmem:[%s1 + $0x8] sm:$0xff]
        %259 = vset.pattern.permute.xlu0 0
        %260 = vperm.xlu0 %259, %v256
        %v261 = vpop.permute.xlu0 %260
        %264 = vset.pattern.permute.xlu0 0
        %265 = vperm.xlu0 %264, %v257
        %v266 = vpop.permute.xlu0 %265
        %v269 = vlaneseq
        %v270 = vshrl.u32 %v269, 7
        %v271 = vsub.s32 0, %v270
        %v272 = vrot.slane %v255, %v271
        %v273 = vlaneseq
        %v274 = vshrl.u32 %v273, 7
        %v275 = vsub.s32 4, %v274
        %v276 = vrot.slane %v255, %v275
        %v279 = vlaneseq
        %v280 = vshrl.u32 %v279, 7
        %v281 = vsub.s32 0, %v280
        %v282 = vrot.slane %v272, %v281
        %v283 = vlaneseq
        %v284 = vshrl.u32 %v283, 7
        %v285 = vsub.s32 0, %v284
        %v286 = vrot.slane %v276, %v285
        %v287 = vmul.f32 %v261, %v282
        %v288 = vmul.f32 %v261, %v286
        %v289 = vmul.f32 %v266, %v282
        %v290 = vmul.f32 %v266, %v286
        %291 = vset.pattern.permute.xlu0 1
        %292 = vperm.xlu0 %291, %v256
        %v293 = vpop.permute.xlu0 %292
        %295 = vset.pattern.permute.xlu0 1
        %296 = vperm.xlu0 %295, %v257
        %v297 = vpop.permute.xlu0 %296
        %v299 = vlaneseq
        %v300 = vshrl.u32 %v299, 7
        %v301 = vsub.s32 1, %v300
        %v302 = vrot.slane %v255, %v301
        %v303 = vlaneseq
        %v304 = vshrl.u32 %v303, 7
        %v305 = vsub.s32 5, %v304
        %v306 = vrot.slane %v255, %v305
        %v309 = vlaneseq
        %v310 = vshrl.u32 %v309, 7
        %v311 = vsub.s32 1, %v310
        %v312 = vrot.slane %v302, %v311
        %v313 = vlaneseq
        %v314 = vshrl.u32 %v313, 7
        %v315 = vsub.s32 1, %v314
        %v316 = vrot.slane %v306, %v315
        %v317 = vmul.f32 %v293, %v312
        %v318 = vmul.f32 %v293, %v316
        %v319 = vmul.f32 %v297, %v312
        %v320 = vmul.f32 %v297, %v316
        %v321 = vadd.f32 %v287, %v317
        %v322 = vadd.f32 %v288, %v318
        %v323 = vadd.f32 %v289, %v319
        %v324 = vadd.f32 %v290, %v320
        %325 = vset.pattern.permute.xlu0 2
        %326 = vperm.xlu0 %325, %v256
        %v327 = vpop.permute.xlu0 %326
        %329 = vset.pattern.permute.xlu0 2
        %330 = vperm.xlu0 %329, %v257
        %v331 = vpop.permute.xlu0 %330
        %v333 = vlaneseq
        %v334 = vshrl.u32 %v333, 7
        %v335 = vsub.s32 2, %v334
        %v336 = vrot.slane %v255, %v335
        %v337 = vlaneseq
        %v338 = vshrl.u32 %v337, 7
        %v339 = vsub.s32 6, %v338
        %v340 = vrot.slane %v255, %v339
        %v343 = vlaneseq
        %v344 = vshrl.u32 %v343, 7
        %v345 = vsub.s32 2, %v344
        %v346 = vrot.slane %v336, %v345
        %v347 = vlaneseq
        %v348 = vshrl.u32 %v347, 7
        %v349 = vsub.s32 2, %v348
        %v350 = vrot.slane %v340, %v349
        %v351 = vmul.f32 %v327, %v346
        %v352 = vmul.f32 %v327, %v350
        %v353 = vmul.f32 %v331, %v346
        %v354 = vmul.f32 %v331, %v350
        %v355 = vadd.f32 %v321, %v351
        %v356 = vadd.f32 %v322, %v352
        %v357 = vadd.f32 %v323, %v353
        %v358 = vadd.f32 %v324, %v354
        %359 = vset.pattern.permute.xlu0 3
        %360 = vperm.xlu0 %359, %v256
        %v361 = vpop.permute.xlu0 %360
        %363 = vset.pattern.permute.xlu0 3
        %364 = vperm.xlu0 %363, %v257
        %v365 = vpop.permute.xlu0 %364
        %v367 = vlaneseq
        %v368 = vshrl.u32 %v367, 7
        %v369 = vsub.s32 3, %v368
        %v370 = vrot.slane %v255, %v369
        %v371 = vlaneseq
        %v372 = vshrl.u32 %v371, 7
        %v373 = vsub.s32 7, %v372
        %v374 = vrot.slane %v255, %v373
        %v377 = vlaneseq
        %v378 = vshrl.u32 %v377, 7
        %v379 = vsub.s32 3, %v378
        %v380 = vrot.slane %v370, %v379
        %v381 = vlaneseq
        %v382 = vshrl.u32 %v381, 7
        %v383 = vsub.s32 3, %v382
        %v384 = vrot.slane %v374, %v383
        %v385 = vmul.f32 %v361, %v380
        %v386 = vmul.f32 %v361, %v384
        %v387 = vmul.f32 %v365, %v380
        %v388 = vmul.f32 %v365, %v384
        %v389 = vadd.f32 %v355, %v385
        %v390 = vadd.f32 %v356, %v386
        %v391 = vadd.f32 %v357, %v387
        %v392 = vadd.f32 %v358, %v388
        %v393 = vld [vmem:[%s2] sm:$0xff]
        %v394 = vld [vmem:[%s2 + $0x8] sm:$0xff]
        %396 = vset.pattern.permute.xlu0 0
        %397 = vperm.xlu0 %396, %v393
        %v398 = vpop.permute.xlu0 %397
        %401 = vset.pattern.permute.xlu0 0
        %402 = vperm.xlu0 %401, %v394
        %v403 = vpop.permute.xlu0 %402
        %v405 = vadd.f32 %v389, %v398
        %v406 = vadd.f32 %v390, %v398
        %v407 = vadd.f32 %v391, %v403
        %v408 = vadd.f32 %v392, %v403
        %v409 = vmax.f32 %v405, 0.0
        %v410 = vmax.f32 %v406, 0.0
        %v411 = vmax.f32 %v407, 0.0
        %v412 = vmax.f32 %v408, 0.0
        %v413 = vld [vmem:[%s3] sm:$0xf]
        %v414 = vld [vmem:[%s3 + $0x4] sm:$0xf]
        %v415 = vld [vmem:[%s3 + $0x8] sm:$0xf]
        %v416 = vld [vmem:[%s3 + $0xc] sm:$0xf]
        %v417 = vpack.c.bf16 %v411, %v409
        %v418 = vpack.c.bf16 %v412, %v410
        %v419 = vld [vmem:[%s4] sm:$0xff]
        %v420 = vld [vmem:[%s4 + $0x8] sm:$0xff]
        %v421 = vld [vmem:[%s4 + $0x10] sm:$0xff]
        %v422 = vld [vmem:[%s4 + $0x18] sm:$0xff]
        %424 = vset.pattern.permute.xlu0 0
        %425 = vperm.xlu0 %424, %v419
        %v426 = vpop.permute.xlu0 %425
        %429 = vset.pattern.permute.xlu0 0
        %430 = vperm.xlu0 %429, %v420
        %v431 = vpop.permute.xlu0 %430
        %434 = vset.pattern.permute.xlu0 0
        %435 = vperm.xlu0 %434, %v421
        %v436 = vpop.permute.xlu0 %435
        %439 = vset.pattern.permute.xlu0 0
        %440 = vperm.xlu0 %439, %v422
        %v441 = vpop.permute.xlu0 %440
        %v447 = vunpack.c.l.b16 %v413
        %v448 = vunpack.c.l.b16 %v414
        %v449 = vunpack.c.l.b16 %v415
        %v450 = vunpack.c.l.b16 %v416
        %v451 = vpack.c.b16 %v448, %v447
        %v452 = vpack.c.b16 %v450, %v449
        %vm453 = vcmask 130048
        %v455 = vsel %vm453, %v451, 0
        %v458 = vsel %vm453, %v452, 0
        %460 = vmatprep.subr.bf16.mxu0 %v418
        %461 = vmatpush1.bf16.msra.mxu0 %v417
        %462 = vmatprep.subr.bf16.mxu0 0
        %463 = vmatpush1.bf16.msra.mxu0 0
        %464 = vmatprep.subr.bf16.mxu0 0
        %465 = vmatpush1.bf16.msra.mxu0 0
        %466 = vmatprep.subr.bf16.mxu0 0
        %467 = vmatpush1.bf16.msra.mxu0 0
        %468 = vmatprep.subr.bf16.mxu0 0
        %469 = vmatpush1.bf16.msra.mxu0 0
        %470 = vmatprep.subr.bf16.mxu0 0
        %471 = vmatpush1.bf16.msra.mxu0 0
        %472 = vmatprep.subr.bf16.mxu0 0
        %473 = vmatpush1.bf16.msra.mxu0 0
        %474 = vmatprep.subr.bf16.mxu0 0
        %475 = vmatpush1.bf16.msra.mxu0 0
        %476 = vmatprep.subr.bf16.mxu0 0
        %477 = vmatpush1.bf16.msra.mxu0 0
        %478 = vmatprep.subr.bf16.mxu0 0
        %479 = vmatpush1.bf16.msra.mxu0 0
        %480 = vmatprep.subr.bf16.mxu0 0
        %481 = vmatpush1.bf16.msra.mxu0 0
        %482 = vmatprep.subr.bf16.mxu0 0
        %483 = vmatpush1.bf16.msra.mxu0 0
        %484 = vmatprep.subr.bf16.mxu0 0
        %485 = vmatpush1.bf16.msra.mxu0 0
        %486 = vmatprep.subr.bf16.mxu0 0
        %487 = vmatpush1.bf16.msra.mxu0 0
        %488 = vmatprep.subr.bf16.mxu0 0
        %489 = vmatpush1.bf16.msra.mxu0 0
        %490 = vmatprep.subr.bf16.mxu0 0
        %491 = vmatpush1.bf16.msra.mxu0 0
        %492 = vmatprep.mubr.bf16.mxu0 0
        %493 = vmatmul.mubr.bf16.gmra.mrb[0].mxu0 %v455
        %v494 = vpop.f32.mrb[0].mxu0
        %v495 = vadd.f32 %v426, %v494
        %v496 = vpop.f32.mrb[0].mxu0
        %v497 = vadd.f32 %v426, %v496
        %v498 = vpop.f32.mrb[0].mxu0
        %v499 = vadd.f32 %v431, %v498
        %v500 = vpop.f32.mrb[0].mxu0
        %v501 = vadd.f32 %v431, %v500
        %502 = vmatprep.mubr.bf16.mxu0 0
        %503 = vmatmul.mubr.bf16.gmra.mrb[0].mxu0 %v458
        %v504 = vpop.f32.mrb[0].mxu0
        %v505 = vadd.f32 %v436, %v504
        %v506 = vpop.f32.mrb[0].mxu0
        %v507 = vadd.f32 %v436, %v506
        %v508 = vpop.f32.mrb[0].mxu0
        %v509 = vadd.f32 %v441, %v508
        %v510 = vpop.f32.mrb[0].mxu0
        %v511 = vadd.f32 %v441, %v510
        %512 = vdwg.mxu0
        %v513 = vmax.f32 %v495, 0.0
        %v514 = vmax.f32 %v497, 0.0
        %v515 = vmax.f32 %v499, 0.0
        %v516 = vmax.f32 %v501, 0.0
        %v517 = vmax.f32 %v505, 0.0
        %v518 = vmax.f32 %v507, 0.0
        %v519 = vmax.f32 %v509, 0.0
        %v520 = vmax.f32 %v511, 0.0
        %v521 = vpack.c.bf16 %v515, %v513
        %v522 = vpack.c.bf16 %v516, %v514
        %v523 = vpack.c.bf16 %v519, %v517
        %v524 = vpack.c.bf16 %v520, %v518
        %v529 = vunpack.c.l.b16 %v521
        %v530 = vunpack.c.l.b16 %v522
        %v531 = vunpack.c.h.b16 %v521
        %v532 = vunpack.c.h.b16 %v522
        %v533 = vunpack.c.l.b16 %v523
        %v534 = vunpack.c.l.b16 %v524
        %v535 = vunpack.c.h.b16 %v523
        %v536 = vunpack.c.h.b16 %v524
        %v537 = vpack.c.b16 %v530, %v529
        %v538 = vpack.c.b16 %v532, %v531
        %v539 = vpack.c.b16 %v534, %v533
        %v540 = vpack.c.b16 %v536, %v535
        %545 = vst [vmem:[%s242] sm:$0xff] %v537
        %546 = vst [vmem:[%s242 + $0x8] sm:$0xff] %v538
        %547 = vst [vmem:[%s242 + $0x10] sm:$0xff] %v539
        %548 = vst [vmem:[%s242 + $0x18] sm:$0xff] %v540
        %s549 = sand.u32 %s153, 1
        %s550 = scalar_lea.sflag [#allocation3], %s549
        %s551 = sand.u32 %s153, 1
        %s552 = smul.addr %s551, 32
        %s553 = scalar_lea.vmem [#allocation2], %s552
        // Predicated region
        $region41: #{tpu_custom_call.1} parent=39 // pred_check
          %p554 = pneg %p163
        $region42: #{tpu_custom_call.1} parent=39 // pred_check_branch
          %556 = sbr.rel (%p554) target = $region44
        $region43: #{tpu_custom_call.1} parent=39 // pred_region
          %s557 = smul.u32 2, %s24
          %s559 = ssub.s32 512, 512
          %560 = vsyncadd %s550, %s559
          %s561 = smul.addr %s23, 8
          %s562 = sadd.s32 %s557, %s561
          %s563 = smul.addr %s562, 64
          %s564 = scalar_lea.hbm %s5, %s563
          %s565 = sshll.u32 %s553, 4
          %s566 = int_to_ptr.vmem [resolvable:$true] %s565
          %571 = dma.vmem_to_hbm [thread:$0]  %s566, 512, %s564, %s550, 128, 128, 8
        $region44: #{tpu_custom_call.1} parent=39 // pred_fallthru
          _
      $region40: #{tpu_custom_call.1} parent=5 // pred_fallthru
        _
      %p572 = scmp.le.s32.totalorder 2, %s14
      // Predicated region
      $region45: #{tpu_custom_call.1} parent=5 // pred_check
        %p573 = pneg %p572
      $region46: #{tpu_custom_call.1} parent=5 // pred_check_branch
        %575 = sbr.rel (%p573) target = $region48
      $region47: #{tpu_custom_call.1} parent=5 // pred_region
        %s576 = ssub.s32 %s14, 2
        // Predicated region
        $region49: #{tpu_custom_call.1} parent=47 // pred_check
          %p577 = pneg %p169
        $region50: #{tpu_custom_call.1} parent=47 // pred_check_branch
          %579 = sbr.rel (%p577) target = $region52
        $region51: #{tpu_custom_call.1} parent=47 // pred_region
          %s580 = sand.u32 %s154, 1
          %s581 = scalar_lea.sflag [#allocation3], %s580
          %s582 = sand.u32 %s154, 1
          %s583 = smul.addr %s582, 32
          %s584 = scalar_lea.vmem [#allocation2], %s583
          %585 = dma.done %s581, 512
        $region52: #{tpu_custom_call.1} parent=47 // pred_fallthru
          _
      $region48: #{tpu_custom_call.1} parent=5 // pred_fallthru
        _
    $region6: #{tpu_custom_call.1} parent=1 // loop_footer
      %s18 = sadd.s32 1, %s14
    $region7: #{tpu_custom_call.1} parent=1 // loop_footer_branch
      %13 = sbr.rel target = $region3
    $region8: #{tpu_custom_call.1} parent=1 // loop_exit
      _
    %586 = vsyncpa [#allocation3], 1
    %s587 = scalar_lea.sflag [#allocation3], 1
    %588 = vsyncpa %s587, 1

</llo_original>
